<compile_context>
chip_gen: v7x
topology: tpu7x:2x2x1
jax: 0.10.0
libtpu: 0.0.40
codegen_flags: <defaults>
</compile_context>

<pallas_src>
import functools

import jax
import jax.numpy as jnp
from jax import lax
from jax.experimental import pallas as pl
from jax.experimental.pallas import tpu as pltpu

BLOCK_CONFIG = (6, 12, 24, 16)        # densenet121
GROWTH, BN_SIZE = 32, 4
NUM_INIT_FEATURES = 64
BN_EPS = 1e-5


def _round_up(x, m):
    return ((x + m - 1) // m) * m


def _tile_m(m):
    for t in (256, 128, 64, 32, 16, 8):
        if m % t == 0:
            return t
    return m


# --------------------------- Pallas matmul kernel -----------------------------
# o = [relu]( (relu(A*sp+tp) if prologue else A) @ B  [ * se + te ] )
@functools.lru_cache(maxsize=None)
def _build_mm(m, k, n, tm, prologue, epilogue, relu_out):
    def kern(*refs):
        it = iter(refs)
        a_ref = next(it)
        b_ref = next(it)
        sp_ref = next(it) if prologue else None
        tp_ref = next(it) if prologue else None
        se_ref = next(it) if epilogue else None
        te_ref = next(it) if epilogue else None
        o_ref = next(it)

        a = a_ref[...]
        if prologue:                       # fused BN(eval)+ReLU on the input
            a = jnp.maximum(a.astype(jnp.float32) * sp_ref[...] + tp_ref[...], 0.0)
            a = a.astype(jnp.bfloat16)
        y = jnp.dot(a, b_ref[...], preferred_element_type=jnp.float32)
        if epilogue:                       # fused BN(eval) on the output
            y = y * se_ref[...] + te_ref[...]
        if relu_out:
            y = jnp.maximum(y, 0.0)
        o_ref[...] = y.astype(o_ref.dtype)

    in_specs = [pl.BlockSpec((tm, k), lambda i: (i, 0)),
                pl.BlockSpec((k, n), lambda i: (0, 0))]
    if prologue:
        in_specs += [pl.BlockSpec((1, k), lambda i: (0, 0)),
                     pl.BlockSpec((1, k), lambda i: (0, 0))]
    if epilogue:
        in_specs += [pl.BlockSpec((1, n), lambda i: (0, 0)),
                     pl.BlockSpec((1, n), lambda i: (0, 0))]

    call = pl.pallas_call(
        kern,
        out_shape=jax.ShapeDtypeStruct((m, n), jnp.bfloat16),
        grid_spec=pltpu.PrefetchScalarGridSpec(
            num_scalar_prefetch=0,
            grid=(m // tm,),
            in_specs=in_specs,
            out_specs=pl.BlockSpec((tm, n), lambda i: (i, 0))),
        compiler_params=pltpu.CompilerParams(
            dimension_semantics=("parallel",)),
    )
    return jax.jit(call)


# --------------- fused norm5 + adaptive_avg_pool2d + flatten + Linear ----------
@functools.lru_cache(maxsize=None)
def _build_pool_fc(n_pad, hw, c, nout_pad):
    inv_hw = 1.0 / float(hw)

    def kern(x_ref, s_ref, t_ref, w_ref, b_ref, o_ref):
        pooled = jnp.sum(x_ref[...].astype(jnp.float32), axis=1) * inv_hw   # (n, c)
        z = pooled * s_ref[...] + t_ref[...]                                # norm5
        o_ref[...] = jnp.dot(z.astype(jnp.bfloat16), w_ref[...],
                             preferred_element_type=jnp.float32) + b_ref[...]

    vm = pl.BlockSpec(memory_space=pltpu.MemorySpace.VMEM)
    call = pl.pallas_call(
        kern,
        out_shape=jax.ShapeDtypeStruct((n_pad, nout_pad), jnp.float32),
        in_specs=[vm, vm, vm, vm, vm],
        out_specs=vm,
    )
    return jax.jit(call)


# ------------------------------ conv wrapper -----------------------------------
def _im2col(x, kh, kw, stride, pad):
    n, h, w, c = x.shape
    if kh == 1 and kw == 1 and stride == 1 and pad == 0:
        return x.reshape(n * h * w, c), (n, h, w)
    xp = jnp.pad(x, ((0, 0), (pad, pad), (pad, pad), (0, 0))) if pad else x
    ho = (h + 2 * pad - kh) // stride + 1
    wo = (w + 2 * pad - kw) // stride + 1
    cols = [xp[:, i:i + stride * ho:stride, j:j + stride * wo:stride, :]
            for i in range(kh) for j in range(kw)]
    a = jnp.concatenate(cols, axis=-1)                       # (n, ho, wo, kh*kw*c)
    return a.reshape(n * ho * wo, kh * kw * c), (n, ho, wo)


def conv_mm(x, w_mat, *, kh, kw, stride, pad,
            p_scale=None, p_shift=None, o_scale=None, o_shift=None,
            relu_out=False):
    """x: NHWC bf16, w_mat: (k_pad, cout) bf16 (pre-transposed & K-padded)."""
    a, (n, ho, wo) = _im2col(x, kh, kw, stride, pad)
    m, k = a.shape
    k_pad, cout = w_mat.shape
    m_pad = max(8, _round_up(m, 8))
    if m_pad != m or k_pad != k:
        a = jnp.pad(a, ((0, m_pad - m), (0, k_pad - k)))

    prologue = p_scale is not None
    epilogue = o_scale is not None
    tm = _tile_m(m_pad)
    fn = _build_mm(m_pad, k_pad, cout, tm, prologue, epilogue, relu_out)

    args = [a, w_mat]
    if prologue:
        args += [p_scale, p_shift]
    if epilogue:
        args += [o_scale, o_shift]
    out = fn(*args)
    if m_pad != m:
        out = out[:m]
    return out.reshape(n, ho, wo, cout)


def pool_fc(x_nhwc, s5, t5, fc_w, fc_b):
    n, h, w, c = x_nhwc.shape
    hw = h * w
    x = x_nhwc.reshape(n, hw, c)
    n_pad = max(8, _round_up(n, 8))
    if n_pad != n:
        x = jnp.pad(x, ((0, n_pad - n), (0, 0), (0, 0)))
    fn = _build_pool_fc(n_pad, hw, c, fc_w.shape[1])
    return fn(x, s5, t5, fc_w, fc_b)[:n]


# ------------------------------ parameter prep ---------------------------------
def _bn_fold(bn, pad_to=None):
    scale = bn['w'] * lax.rsqrt(bn['v'] + BN_EPS)
    shift = bn['b'] - bn['m'] * scale
    c = scale.shape[0]
    k = pad_to if pad_to is not None else c
    s = jnp.zeros((1, k), jnp.float32).at[0, :c].set(scale.astype(jnp.float32))
    t = jnp.zeros((1, k), jnp.float32).at[0, :c].set(shift.astype(jnp.float32))
    return s, t


def _conv_mat(w, k_pad=None):
    """PyTorch (Cout,Cin,KH,KW) -> (KH*KW*Cin, Cout), zero-padded to k_pad rows, bf16."""
    cout, cin, kh, kw = w.shape
    mat = jnp.transpose(w, (2, 3, 1, 0)).reshape(kh * kw * cin, cout)
    k = mat.shape[0]
    if k_pad is not None and k_pad != k:
        mat = jnp.pad(mat, ((0, k_pad - k), (0, 0)))
    return mat.astype(jnp.bfloat16)


def prep_params(params, num_outputs=5):
    prep = {}
    s0, t0 = _bn_fold(params['norm0'])
    prep['conv0'] = dict(w=_conv_mat(params['conv0'], _round_up(3 * 7 * 7, 128)),
                         s=s0, t=t0)
    for bi in range(4):
        layers = []
        for lp in params[f'block{bi + 1}']:
            cin = lp['conv1'].shape[1]
            kp = _round_up(cin, 128)
            s1, t1 = _bn_fold(lp['norm1'], pad_to=kp)      # prologue of conv1
            s2, t2 = _bn_fold(lp['norm2'])                 # epilogue of conv1
            layers.append(dict(w1=_conv_mat(lp['conv1'], kp), s1=s1, t1=t1,
                               s2=s2, t2=t2,
                               w2=_conv_mat(lp['conv2'])))
        prep[f'block{bi + 1}'] = layers
        if bi < 3:
            tp = params[f'trans{bi + 1}']
            cin = tp['conv'].shape[1]
            kp = _round_up(cin, 128)
            st, tt = _bn_fold(tp['norm'], pad_to=kp)       # prologue of trans conv
            prep[f'trans{bi + 1}'] = dict(w=_conv_mat(tp['conv'], kp), s=st, t=tt)

    prep['norm5_s'], prep['norm5_t'] = _bn_fold(params['norm5'])
    c = params['fc_w'].shape[1]
    nout_pad = _round_up(num_outputs, 128)                 # lane-dense output slab
    fcw = jnp.zeros((c, nout_pad), jnp.float32).at[:, :num_outputs].set(params['fc_w'].T)
    fcb = jnp.zeros((1, nout_pad), jnp.float32).at[0, :num_outputs].set(params['fc_b'])
    prep['fc_w'] = fcw.astype(jnp.bfloat16)
    prep['fc_b'] = fcb
    return prep


# ------------------------------ forward pass ------------------------------------
def densenet_forward(prep, x_nchw, num_outputs=5):
    x = jnp.transpose(x_nchw, (0, 2, 3, 1)).astype(jnp.bfloat16)   # NCHW -> NHWC

    # --- stem: conv0 7x7/2 with fused norm0+relu epilogue, then maxpool 3x3/2 ---
    c0 = prep['conv0']
    y = conv_mm(x, c0['w'], kh=7, kw=7, stride=2, pad=3,
                o_scale=c0['s'], o_shift=c0['t'], relu_out=True)
    # TODO(synk): MaxPool2d 3x3/2 done with lax.reduce_window glue (not a Pallas kernel).
    y = lax.reduce_window(y, jnp.array(-jnp.inf, y.dtype), lax.max,
                          (1, 3, 3, 1), (1, 2, 2, 1),
                          ((0, 0), (1, 1), (1, 1), (0, 0)))

    # --- dense blocks + transitions ---
    for bi in range(4):
        feats = y
        for lp in prep[f'block{bi + 1}']:
            # 1x1 bottleneck: prologue = norm1+relu, epilogue = norm2+relu
            h = conv_mm(feats, lp['w1'], kh=1, kw=1, stride=1, pad=0,
                        p_scale=lp['s1'], p_shift=lp['t1'],
                        o_scale=lp['s2'], o_shift=lp['t2'], relu_out=True)
            # 3x3 growth conv on the already-activated, zero-padded input
            h = conv_mm(h, lp['w2'], kh=3, kw=3, stride=1, pad=1)
            feats = jnp.concatenate([feats, h], axis=-1)
        y = feats
        if bi < 3:
            tr = prep[f'trans{bi + 1}']
            # transition: prologue = norm+relu, 1x1 conv, then AvgPool2d(2)
            y = conv_mm(y, tr['w'], kh=1, kw=1, stride=1, pad=0,
                        p_scale=tr['s'], p_shift=tr['t'])
            n_, h_, w_, c_ = y.shape
            y = (y.reshape(n_, h_ // 2, 2, w_ // 2, 2, c_)
                  .astype(jnp.float32).mean(axis=(2, 4)).astype(jnp.bfloat16))

    # --- norm5 + adaptive_avg_pool2d((1,1)) + flatten + Linear, one fused kernel ---
    out = pool_fc(y, prep['norm5_s'], prep['norm5_t'], prep['fc_w'], prep['fc_b'])
    return out[:, :num_outputs]


# ------------------------------ deterministic params ---------------------------
def _conv_init(key, cout, cin, kh, kw):
    std = (2.0 / (cin * kh * kw)) ** 0.5
    return std * jax.random.normal(key, (cout, cin, kh, kw), jnp.float32)


def _bn_init(key, c):
    k1, k2, k3, k4 = jax.random.split(key, 4)
    return dict(
        w=1.0 + 0.1 * jax.random.normal(k1, (c,), jnp.float32),
        b=0.05 * jax.random.normal(k2, (c,), jnp.float32),
        m=0.05 * jax.random.normal(k3, (c,), jnp.float32),
        v=1.0 + 0.1 * jax.random.uniform(k4, (c,), jnp.float32),
    )


def make_params(key, num_outputs=5):
    keys = iter(jax.random.split(key, 512))
    nk = lambda: next(keys)
    p = {'conv0': _conv_init(nk(), NUM_INIT_FEATURES, 3, 7, 7),
         'norm0': _bn_init(nk(), NUM_INIT_FEATURES)}
    num_feat = NUM_INIT_FEATURES
    for bi, nl in enumerate(BLOCK_CONFIG):
        layers = []
        for li in range(nl):
            cin = num_feat + li * GROWTH
            layers.append(dict(
                norm1=_bn_init(nk(), cin),
                conv1=_conv_init(nk(), BN_SIZE * GROWTH, cin, 1, 1),
                norm2=_bn_init(nk(), BN_SIZE * GROWTH),
                conv2=_conv_init(nk(), GROWTH, BN_SIZE * GROWTH, 3, 3)))
        p[f'block{bi + 1}'] = layers
        num_feat = num_feat + nl * GROWTH
        if bi < 3:
            p[f'trans{bi + 1}'] = dict(
                norm=_bn_init(nk(), num_feat),
                conv=_conv_init(nk(), num_feat // 2, num_feat, 1, 1))
            num_feat //= 2
    p['norm5'] = _bn_init(nk(), num_feat)                       # 1024 channels
    p['fc_w'] = 0.02 * jax.random.normal(nk(), (num_outputs, num_feat), jnp.float32)
    p['fc_b'] = 0.01 * jax.random.normal(nk(), (num_outputs,), jnp.float32)
    return p


# ------------------------------------ main --------------------------------------
if __name__ == "__main__":
    num_outputs = 5
    params = make_params(jax.random.PRNGKey(42), num_outputs=num_outputs)
    prep = prep_params(params, num_outputs=num_outputs)

    x = jax.random.normal(jax.random.PRNGKey(0), (2, 3, 32, 32), jnp.float32)  # NCHW

    out = densenet_forward(prep, x, num_outputs=num_outputs)
    out = jax.block_until_ready(out)

    assert out.shape == (2, num_outputs), out.shape
    assert bool(jnp.all(jnp.isfinite(out)))
    print("KERNEL_OK")
</pallas_src>

<mosaic_0001>
module attributes {stable_mosaic.version = 11 : i64} {
  func.func @kern(%arg0: i32, %arg1: memref<256x256xbf16, #tpu.memory_space<vmem>>, %arg2: memref<256x64xbf16, #tpu.memory_space<vmem>>, %arg3: memref<1x64xf32, #tpu.memory_space<vmem>>, %arg4: memref<1x64xf32, #tpu.memory_space<vmem>>, %arg5: memref<256x64xbf16, #tpu.memory_space<vmem>>) attributes {dimension_semantics = [#tpu.dimension_semantics<parallel>], iteration_bounds = array<i64: 2>, scalar_prefetch = 0 : i64, scratch_operands = 0 : i64, tpu.core_type = #tpu.core_type<tc>, window_params = [{transform_indices = @transform_0, window_bounds = array<i64: 256, 256>}, {pipeline_mode = #tpu.pipeline_mode<synchronous>, transform_indices = @transform_1, window_bounds = array<i64: 256, 64>}, {pipeline_mode = #tpu.pipeline_mode<synchronous>, transform_indices = @transform_2, window_bounds = array<i64: 1, 64>}, {pipeline_mode = #tpu.pipeline_mode<synchronous>, transform_indices = @transform_3, window_bounds = array<i64: 1, 64>}, {transform_indices = @transform_4, window_bounds = array<i64: 256, 64>}]} {
    %c0 = arith.constant 0 : index
    %c0_0 = arith.constant 0 : index
    %0 = vector.load %arg1[%c0, %c0_0] : memref<256x256xbf16, #tpu.memory_space<vmem>>, vector<256x256xbf16>
    %c0_1 = arith.constant 0 : index
    %c0_2 = arith.constant 0 : index
    %1 = vector.load %arg2[%c0_1, %c0_2] : memref<256x64xbf16, #tpu.memory_space<vmem>>, vector<256x64xbf16>
    %cst = arith.constant dense<0.000000e+00> : vector<256x64xf32>
    %2 = tpu.matmul %0, %1, %cst {dimension_numbers = #tpu.dot_dimension_numbers<[1], [0], [0], [1], [0, 0, 1, 1], [], []>} : vector<256x256xbf16>, vector<256x64xbf16>, vector<256x64xf32> -> vector<256x64xf32>
    %c0_3 = arith.constant 0 : index
    %c0_4 = arith.constant 0 : index
    %3 = vector.load %arg3[%c0_3, %c0_4] : memref<1x64xf32, #tpu.memory_space<vmem>>, vector<1x64xf32>
    %4 = vector.broadcast %3 : vector<1x64xf32> to vector<256x64xf32>
    %5 = arith.mulf %2, %4 : vector<256x64xf32>
    %c0_5 = arith.constant 0 : index
    %c0_6 = arith.constant 0 : index
    %6 = vector.load %arg4[%c0_5, %c0_6] : memref<1x64xf32, #tpu.memory_space<vmem>>, vector<1x64xf32>
    %7 = vector.broadcast %6 : vector<1x64xf32> to vector<256x64xf32>
    %8 = arith.addf %5, %7 : vector<256x64xf32>
    %cst_7 = arith.constant 0.000000e+00 : f32
    %9 = vector.broadcast %cst_7 : f32 to vector<256x64xf32>
    %10 = arith.maximumf %8, %9 : vector<256x64xf32>
    %11 = arith.truncf %10 : vector<256x64xf32> to vector<256x64xbf16>
    %c0_8 = arith.constant 0 : index
    %c0_9 = arith.constant 0 : index
    %12 = vector.load %arg5[%c0_8, %c0_9] : memref<256x64xbf16, #tpu.memory_space<vmem>>, vector<256x64xbf16>
    tpu.vector_store %arg5[%c0_8, %c0_9], %11 {strides = array<i32>} : memref<256x64xbf16, #tpu.memory_space<vmem>>, vector<256x64xbf16>,
    return
  }
  func.func @transform_0(%arg0: i32) -> (i32, i32) {
    %c0_i32 = arith.constant 0 : i32
    %c0_i32_0 = arith.constant 0 : i32
    return %arg0, %c0_i32 : i32, i32
  }
  func.func @transform_1(%arg0: i32) -> (i32, i32) {
    %c0_i32 = arith.constant 0 : i32
    %c0_i32_0 = arith.constant 0 : i32
    %c0_i32_1 = arith.constant 0 : i32
    return %c0_i32, %c0_i32_0 : i32, i32
  }
  func.func @transform_2(%arg0: i32) -> (i32, i32) {
    %c0_i32 = arith.constant 0 : i32
    %c0_i32_0 = arith.constant 0 : i32
    %c0_i32_1 = arith.constant 0 : i32
    return %c0_i32, %c0_i32_0 : i32, i32
  }
  func.func @transform_3(%arg0: i32) -> (i32, i32) {
    %c0_i32 = arith.constant 0 : i32
    %c0_i32_0 = arith.constant 0 : i32
    %c0_i32_1 = arith.constant 0 : i32
    return %c0_i32, %c0_i32_0 : i32, i32
  }
  func.func @transform_4(%arg0: i32) -> (i32, i32) {
    %c0_i32 = arith.constant 0 : i32
    %c0_i32_0 = arith.constant 0 : i32
    return %arg0, %c0_i32 : i32, i32
  }
}

</mosaic_0001>

<llo_original>
// kernel: tpu_custom_call.1
$region0: #{tpu_custom_call.1}
  #allocation0 [shape = 'u32[]', space=smem, size = 0x4, offset = 0x4, fixed_abs, tag = 'smem constant byte address 0x4 - core index']
  #allocation1 [shape = 'u32[144,128]{1,0:T(1,128)}', space=vmem, size = 0x12000, scoped, tag = 'internal scratch']
  %s0 = inlined_call_operand.hbm [shape: bf16[512,256], index: 0, kind: input, shape index: {}]
  %s1 = inlined_call_operand.vmem [shape: bf16[256,64], index: 1, kind: input, shape index: {}]
  %s2 = inlined_call_operand.vmem [shape: f32[1,64], index: 2, kind: input, shape index: {}]
  %s3 = inlined_call_operand.vmem [shape: f32[1,64], index: 3, kind: input, shape index: {}]
  %s4 = inlined_call_operand.vmem [shape: bf16[512,64], index: 4, kind: output, shape index: {}]
  %s5 = sld [smem:[#allocation0]]
  $region53: #{tpu_custom_call.1} parent=0
    _
  %s7 = ssub.s32 1, %s5
  %s8 = scalar_select 0, %s7, %s5
  $region1: #{tpu_custom_call.1} parent=0
    #allocation2 [shape = 'u8[262144]{0}', space=vmem, size = 0x40000, scoped, tag = 'input window, operand 0']
    #allocation3 [shape = 's32[2]{0}', space=sflag, size = 0x8, scoped, tag = 'scoped memory for tpu_custom_call.1']
    %9 = vsyncpa [#allocation3], 0
    %s10 = scalar_lea.sflag [#allocation3], 1
    %11 = vsyncpa %s10, 0
    loop: start=0, step=1, limit=4
    $region2: #{tpu_custom_call.1} parent=1 // loop_pre_header
      _
    $region3: #{tpu_custom_call.1} parent=1 // loop_header
      %s13 = sphi 0, %s17
      %p14 = scmp.ge.s32.totalorder %s13, 4
      %s23 = sphi 0, %s25
      %s26 = sphi 0, %s23
      %s27 = sphi 0, %s26
      %s43 = sphi 0, %s27
      %s47 = sphi 0, %s47
      %s49 = sphi 0, %s47
      %s50 = sphi 0, %s49
      %s64 = sphi 0, %s50
      %s68 = sphi 0, %s68
      %s70 = sphi 0, %s68
      %s71 = sphi 0, %s70
      %s85 = sphi 0, %s71
      %s89 = sphi 0, %s89
      %s91 = sphi 0, %s89
      %s92 = sphi 0, %s91
      %s106 = sphi 0, %s92
      %s112 = sphi 0, %s114
      %s115 = sphi 0, %s112
      %s116 = sphi 0, %s115
      %s132 = sphi 0, %s116
    $region4: #{tpu_custom_call.1} parent=1 // loop_header_branch
      %16 = sbr.rel (%p14) target = $region8
    $region5: #{tpu_custom_call.1} parent=1 // loop_body
      %s18 = ssub.s32 %s13, 1
      %s19 = ssub.s32 %s13, 2
      %s20 = sadd.s32 %s13, 1
      %s21 = ssub.s32 %s13, %s20
      %p22 = scmp.eq.s32.totalorder %s21, 0
      %s24 = sadd.s32 %s23, 1
      %s25 = scalar_select %p22, %s23, %s24
      %p28 = pneg %p22
      %p29 = scmp.eq.s32.totalorder %s13, 1
      %p30 = por %p28, %p29
      %p31 = scmp.ne.s32.totalorder %s23, %s26
      %p32 = scmp.eq.s32.totalorder %s13, 0
      %p33 = por %p31, %p32
      %p34 = scmp.ne.s32.totalorder %s23, %s26
      %p35 = scmp.eq.s32.totalorder %s18, 1
      %p36 = por %p34, %p35
      %p37 = scmp.ne.s32.totalorder %s26, %s27
      %p38 = scmp.eq.s32.totalorder %s18, 0
      %p39 = por %p37, %p38
      %p40 = scmp.ne.s32.totalorder %s26, %s27
      %p41 = scmp.eq.s32.totalorder %s19, 1
      %p42 = por %p40, %p41
      %p44 = scmp.ne.s32.totalorder %s27, %s43
      %p45 = scmp.eq.s32.totalorder %s19, 0
      %p46 = por %p44, %p45
      %s48 = sadd.s32 %s47, 1
      %p51 = scmp.eq.s32.totalorder %s13, 1
      %p52 = scmp.ne.s32.totalorder %s47, %s49
      %p53 = scmp.eq.s32.totalorder %s13, 0
      %p54 = por %p52, %p53
      %p55 = scmp.ne.s32.totalorder %s47, %s49
      %p56 = scmp.eq.s32.totalorder %s18, 1
      %p57 = por %p55, %p56
      %p58 = scmp.ne.s32.totalorder %s49, %s50
      %p59 = scmp.eq.s32.totalorder %s18, 0
      %p60 = por %p58, %p59
      %p61 = scmp.ne.s32.totalorder %s49, %s50
      %p62 = scmp.eq.s32.totalorder %s19, 1
      %p63 = por %p61, %p62
      %p65 = scmp.ne.s32.totalorder %s50, %s64
      %p66 = scmp.eq.s32.totalorder %s19, 0
      %p67 = por %p65, %p66
      %s69 = sadd.s32 %s68, 1
      %p72 = scmp.eq.s32.totalorder %s13, 1
      %p73 = scmp.ne.s32.totalorder %s68, %s70
      %p74 = scmp.eq.s32.totalorder %s13, 0
      %p75 = por %p73, %p74
      %p76 = scmp.ne.s32.totalorder %s68, %s70
      %p77 = scmp.eq.s32.totalorder %s18, 1
      %p78 = por %p76, %p77
      %p79 = scmp.ne.s32.totalorder %s70, %s71
      %p80 = scmp.eq.s32.totalorder %s18, 0
      %p81 = por %p79, %p80
      %p82 = scmp.ne.s32.totalorder %s70, %s71
      %p83 = scmp.eq.s32.totalorder %s19, 1
      %p84 = por %p82, %p83
      %p86 = scmp.ne.s32.totalorder %s71, %s85
      %p87 = scmp.eq.s32.totalorder %s19, 0
      %p88 = por %p86, %p87
      %s90 = sadd.s32 %s89, 1
      %p93 = scmp.eq.s32.totalorder %s13, 1
      %p94 = scmp.ne.s32.totalorder %s89, %s91
      %p95 = scmp.eq.s32.totalorder %s13, 0
      %p96 = por %p94, %p95
      %p97 = scmp.ne.s32.totalorder %s89, %s91
      %p98 = scmp.eq.s32.totalorder %s18, 1
      %p99 = por %p97, %p98
      %p100 = scmp.ne.s32.totalorder %s91, %s92
      %p101 = scmp.eq.s32.totalorder %s18, 0
      %p102 = por %p100, %p101
      %p103 = scmp.ne.s32.totalorder %s91, %s92
      %p104 = scmp.eq.s32.totalorder %s19, 1
      %p105 = por %p103, %p104
      %p107 = scmp.ne.s32.totalorder %s92, %s106
      %p108 = scmp.eq.s32.totalorder %s19, 0
      %p109 = por %p107, %p108
      %s110 = ssub.s32 %s13, %s20
      %p111 = scmp.eq.s32.totalorder %s110, 0
      %s113 = sadd.s32 %s112, 1
      %s114 = scalar_select %p111, %s112, %s113
      %p117 = pneg %p111
      %p118 = scmp.eq.s32.totalorder %s13, 1
      %p119 = por %p117, %p118
      %p120 = scmp.ne.s32.totalorder %s112, %s115
      %p121 = scmp.eq.s32.totalorder %s13, 0
      %p122 = por %p120, %p121
      %p123 = scmp.ne.s32.totalorder %s112, %s115
      %p124 = scmp.eq.s32.totalorder %s18, 1
      %p125 = por %p123, %p124
      %p126 = scmp.ne.s32.totalorder %s115, %s116
      %p127 = scmp.eq.s32.totalorder %s18, 0
      %p128 = por %p126, %p127
      %p129 = scmp.ne.s32.totalorder %s115, %s116
      %p130 = scmp.eq.s32.totalorder %s19, 1
      %p131 = por %p129, %p130
      %p133 = scmp.ne.s32.totalorder %s116, %s132
      %p134 = scmp.eq.s32.totalorder %s19, 0
      %p135 = por %p133, %p134
      %p136 = scmp.le.s32.totalorder 1, %s13
      %p137 = scmp.lt.s32.totalorder %s13, 3
      %p138 = pnand %p136, %p137
      %p139 = pneg %p138
      // Predicated region
      $region9: #{tpu_custom_call.1} parent=5 // pred_check
        _
      $region10: #{tpu_custom_call.1} parent=5 // pred_check_branch
        %141 = sbr.rel (%p138) target = $region12
      $region11: #{tpu_custom_call.1} parent=5 // pred_region
        %s142 = ssub.s32 %s13, 1
        // Predicated region
        $region13: #{tpu_custom_call.1} parent=11 // pred_check
          %p143 = pneg %p60
        $region14: #{tpu_custom_call.1} parent=11 // pred_check_branch
          %145 = sbr.rel (%p143) target = $region16
        $region15: #{tpu_custom_call.1} parent=11 // pred_region
          _
        $region16: #{tpu_custom_call.1} parent=11 // pred_fallthru
          _
        // Predicated region
        $region17: #{tpu_custom_call.1} parent=11 // pred_check
          %p146 = pneg %p81
        $region18: #{tpu_custom_call.1} parent=11 // pred_check_branch
          %148 = sbr.rel (%p146) target = $region20
        $region19: #{tpu_custom_call.1} parent=11 // pred_region
          _
        $region20: #{tpu_custom_call.1} parent=11 // pred_fallthru
          _
        // Predicated region
        $region21: #{tpu_custom_call.1} parent=11 // pred_check
          %p149 = pneg %p102
        $region22: #{tpu_custom_call.1} parent=11 // pred_check_branch
          %151 = sbr.rel (%p149) target = $region24
        $region23: #{tpu_custom_call.1} parent=11 // pred_region
          _
        $region24: #{tpu_custom_call.1} parent=11 // pred_fallthru
          _
      $region12: #{tpu_custom_call.1} parent=5 // pred_fallthru
        _
      %p152 = scmp.lt.s32.totalorder %s13, 2
      // Predicated region
      $region25: #{tpu_custom_call.1} parent=5 // pred_check
        %p153 = pneg %p152
      $region26: #{tpu_custom_call.1} parent=5 // pred_check_branch
        %155 = sbr.rel (%p153) target = $region28
      $region27: #{tpu_custom_call.1} parent=5 // pred_region
        // Predicated region
        $region29: #{tpu_custom_call.1} parent=27 // pred_check
          %p156 = pneg %p33
        $region30: #{tpu_custom_call.1} parent=27 // pred_check_branch
          %158 = sbr.rel (%p156) target = $region32
        $region31: #{tpu_custom_call.1} parent=27 // pred_region
          %s159 = sand.u32 %s23, 1
          %s160 = scalar_lea.sflag [#allocation3], %s159
          %s161 = sand.u32 %s23, 1
          %s162 = smul.addr %s161, 256
          %s163 = scalar_lea.vmem [#allocation2], %s162
          %s164 = smul.u32 32, %s13
          %s166 = ssub.s32 4096, 4096
          %167 = vsyncadd %s160, %s166
          %s168 = smul.addr %s164, 2
          %s169 = smul.addr %s168, 64
          %s170 = scalar_lea.hbm %s0, %s169
          %s171 = sshll.u32 %s163, 4
          %s172 = int_to_ptr.vmem [resolvable:$true] %s171
          %177 = dma.hbm_to_vmem [thread:$0]  %s170, 4096, %s172, %s160, 128, 128, 8
        $region32: #{tpu_custom_call.1} parent=27 // pred_fallthru
          _
      $region28: #{tpu_custom_call.1} parent=5 // pred_fallthru
        _
      %p178 = scmp.le.s32.totalorder 1, %s13
      %p179 = scmp.lt.s32.totalorder %s13, 3
      %p180 = pnand %p178, %p179
      %p181 = pneg %p180
      // Predicated region
      $region33: #{tpu_custom_call.1} parent=5 // pred_check
        _
      $region34: #{tpu_custom_call.1} parent=5 // pred_check_branch
        %183 = sbr.rel (%p180) target = $region36
      $region35: #{tpu_custom_call.1} parent=5 // pred_region
        %s184 = ssub.s32 %s13, 1
        %s185 = sand.u32 %s26, 1
        %s186 = scalar_lea.sflag [#allocation3], %s185
        %s187 = sand.u32 %s26, 1
        %s188 = smul.addr %s187, 256
        %s189 = scalar_lea.vmem [#allocation2], %s188
        // Predicated region
        $region37: #{tpu_custom_call.1} parent=35 // pred_check
          %p190 = pneg %p39
        $region38: #{tpu_custom_call.1} parent=35 // pred_check_branch
          %192 = sbr.rel (%p190) target = $region40
        $region39: #{tpu_custom_call.1} parent=35 // pred_region
          %193 = dma.done %s186, 4096
        $region40: #{tpu_custom_call.1} parent=35 // pred_fallthru
          _
        %s194 = sand.u32 %s26, 1
        %s195 = scalar_lea.sflag [#allocation3], %s194
        %s196 = sand.u32 %s26, 1
        %s197 = smul.addr %s196, 256
        %s198 = scalar_lea.vmem [#allocation2], %s197
        %p199 = pneg %p39
        %p200 = pneg %p36
        %p201 = pneg %p60
        %p202 = pneg %p57
        %p203 = pneg %p81
        %p204 = pneg %p78
        %p205 = pneg %p102
        %p206 = pneg %p99
        %p207 = pneg %p128
        %p208 = pneg %p125
        %s209 = smul.u32 32, %s18
        %p210 = scmp.lt.s32.totalorder %s209, 63
        %s211 = scalar_select %p210, %s209, 63
        %s212 = smul.addr %s211, 4
        %s213 = scalar_lea.vmem %s4, %s212
        %s214 = smul.u32 32, %s18
        %s215 = smul.u32 32, %s18
        %p216 = scmp.lt.s32.totalorder %s215, 63
        %s217 = scalar_select %p216, %s215, 63
        %s218 = smul.addr %s217, 4
        %s219 = scalar_lea.vmem %s4, %s218
        %s220 = smul.u32 32, %s18
        %v222 = vld [vmem:[%s189] sm:$0xff]
        %v223 = vld [vmem:[%s189 + $0x8] sm:$0xff]
        %v224 = vld [vmem:[%s189 + $0x10] sm:$0xff]
        %v225 = vld [vmem:[%s189 + $0x18] sm:$0xff]
        %v226 = vld [vmem:[%s189 + $0x20] sm:$0xff]
        %v227 = vld [vmem:[%s189 + $0x28] sm:$0xff]
        %v228 = vld [vmem:[%s189 + $0x30] sm:$0xff]
        %v229 = vld [vmem:[%s189 + $0x38] sm:$0xff]
        %v230 = vld [vmem:[%s189 + $0x40] sm:$0xff]
        %v231 = vld [vmem:[%s189 + $0x48] sm:$0xff]
        %v232 = vld [vmem:[%s189 + $0x50] sm:$0xff]
        %v233 = vld [vmem:[%s189 + $0x58] sm:$0xff]
        %v234 = vld [vmem:[%s189 + $0x60] sm:$0xff]
        %v235 = vld [vmem:[%s189 + $0x68] sm:$0xff]
        %v236 = vld [vmem:[%s189 + $0x70] sm:$0xff]
        %v237 = vld [vmem:[%s189 + $0x78] sm:$0xff]
        %v238 = vld [vmem:[%s189 + $0x80] sm:$0xff]
        %v239 = vld [vmem:[%s189 + $0x88] sm:$0xff]
        %v240 = vld [vmem:[%s189 + $0x90] sm:$0xff]
        %v241 = vld [vmem:[%s189 + $0x98] sm:$0xff]
        %v242 = vld [vmem:[%s189 + $0xa0] sm:$0xff]
        %v243 = vld [vmem:[%s189 + $0xa8] sm:$0xff]
        %v244 = vld [vmem:[%s189 + $0xb0] sm:$0xff]
        %v245 = vld [vmem:[%s189 + $0xb8] sm:$0xff]
        %v246 = vld [vmem:[%s189 + $0xc0] sm:$0xff]
        %v247 = vld [vmem:[%s189 + $0xc8] sm:$0xff]
        %v248 = vld [vmem:[%s189 + $0xd0] sm:$0xff]
        %v249 = vld [vmem:[%s189 + $0xd8] sm:$0xff]
        %v250 = vld [vmem:[%s189 + $0xe0] sm:$0xff]
        %v251 = vld [vmem:[%s189 + $0xe8] sm:$0xff]
        %v252 = vld [vmem:[%s189 + $0xf0] sm:$0xff]
        %v253 = vld [vmem:[%s189 + $0xf8] sm:$0xff]
        %v254 = vld [vmem:[%s1] sm:$0xf]
        %v255 = vld [vmem:[%s1 + $0x4] sm:$0xf]
        %v256 = vld [vmem:[%s1 + $0x8] sm:$0xf]
        %v257 = vld [vmem:[%s1 + $0xc] sm:$0xf]
        %v258 = vld [vmem:[%s1 + $0x10] sm:$0xf]
        %v259 = vld [vmem:[%s1 + $0x14] sm:$0xf]
        %v260 = vld [vmem:[%s1 + $0x18] sm:$0xf]
        %v261 = vld [vmem:[%s1 + $0x1c] sm:$0xf]
        %v262 = vld [vmem:[%s1 + $0x20] sm:$0xf]
        %v263 = vld [vmem:[%s1 + $0x24] sm:$0xf]
        %v264 = vld [vmem:[%s1 + $0x28] sm:$0xf]
        %v265 = vld [vmem:[%s1 + $0x2c] sm:$0xf]
        %v266 = vld [vmem:[%s1 + $0x30] sm:$0xf]
        %v267 = vld [vmem:[%s1 + $0x34] sm:$0xf]
        %v268 = vld [vmem:[%s1 + $0x38] sm:$0xf]
        %v269 = vld [vmem:[%s1 + $0x3c] sm:$0xf]
        %v270 = vld [vmem:[%s1 + $0x40] sm:$0xf]
        %v271 = vld [vmem:[%s1 + $0x44] sm:$0xf]
        %v272 = vld [vmem:[%s1 + $0x48] sm:$0xf]
        %v273 = vld [vmem:[%s1 + $0x4c] sm:$0xf]
        %v274 = vld [vmem:[%s1 + $0x50] sm:$0xf]
        %v275 = vld [vmem:[%s1 + $0x54] sm:$0xf]
        %v276 = vld [vmem:[%s1 + $0x58] sm:$0xf]
        %v277 = vld [vmem:[%s1 + $0x5c] sm:$0xf]
        %v278 = vld [vmem:[%s1 + $0x60] sm:$0xf]
        %v279 = vld [vmem:[%s1 + $0x64] sm:$0xf]
        %v280 = vld [vmem:[%s1 + $0x68] sm:$0xf]
        %v281 = vld [vmem:[%s1 + $0x6c] sm:$0xf]
        %v282 = vld [vmem:[%s1 + $0x70] sm:$0xf]
        %v283 = vld [vmem:[%s1 + $0x74] sm:$0xf]
        %v284 = vld [vmem:[%s1 + $0x78] sm:$0xf]
        %v285 = vld [vmem:[%s1 + $0x7c] sm:$0xf]
        %v318 = vunpack.c.l.b16 %v222
        %v319 = vunpack.c.h.b16 %v222
        %v320 = vunpack.c.l.b16 %v223
        %v321 = vunpack.c.h.b16 %v223
        %v322 = vunpack.c.l.b16 %v224
        %v323 = vunpack.c.h.b16 %v224
        %v324 = vunpack.c.l.b16 %v225
        %v325 = vunpack.c.h.b16 %v225
        %v326 = vunpack.c.l.b16 %v226
        %v327 = vunpack.c.h.b16 %v226
        %v328 = vunpack.c.l.b16 %v227
        %v329 = vunpack.c.h.b16 %v227
        %v330 = vunpack.c.l.b16 %v228
        %v331 = vunpack.c.h.b16 %v228
        %v332 = vunpack.c.l.b16 %v229
        %v333 = vunpack.c.h.b16 %v229
        %v334 = vunpack.c.l.b16 %v230
        %v335 = vunpack.c.h.b16 %v230
        %v336 = vunpack.c.l.b16 %v231
        %v337 = vunpack.c.h.b16 %v231
        %v338 = vunpack.c.l.b16 %v232
        %v339 = vunpack.c.h.b16 %v232
        %v340 = vunpack.c.l.b16 %v233
        %v341 = vunpack.c.h.b16 %v233
        %v342 = vunpack.c.l.b16 %v234
        %v343 = vunpack.c.h.b16 %v234
        %v344 = vunpack.c.l.b16 %v235
        %v345 = vunpack.c.h.b16 %v235
        %v346 = vunpack.c.l.b16 %v236
        %v347 = vunpack.c.h.b16 %v236
        %v348 = vunpack.c.l.b16 %v237
        %v349 = vunpack.c.h.b16 %v237
        %v350 = vunpack.c.l.b16 %v238
        %v351 = vunpack.c.h.b16 %v238
        %v352 = vunpack.c.l.b16 %v239
        %v353 = vunpack.c.h.b16 %v239
        %v354 = vunpack.c.l.b16 %v240
        %v355 = vunpack.c.h.b16 %v240
        %v356 = vunpack.c.l.b16 %v241
        %v357 = vunpack.c.h.b16 %v241
        %v358 = vunpack.c.l.b16 %v242
        %v359 = vunpack.c.h.b16 %v242
        %v360 = vunpack.c.l.b16 %v243
        %v361 = vunpack.c.h.b16 %v243
        %v362 = vunpack.c.l.b16 %v244
        %v363 = vunpack.c.h.b16 %v244
        %v364 = vunpack.c.l.b16 %v245
        %v365 = vunpack.c.h.b16 %v245
        %v366 = vunpack.c.l.b16 %v246
        %v367 = vunpack.c.h.b16 %v246
        %v368 = vunpack.c.l.b16 %v247
        %v369 = vunpack.c.h.b16 %v247
        %v370 = vunpack.c.l.b16 %v248
        %v371 = vunpack.c.h.b16 %v248
        %v372 = vunpack.c.l.b16 %v249
        %v373 = vunpack.c.h.b16 %v249
        %v374 = vunpack.c.l.b16 %v250
        %v375 = vunpack.c.h.b16 %v250
        %v376 = vunpack.c.l.b16 %v251
        %v377 = vunpack.c.h.b16 %v251
        %v378 = vunpack.c.l.b16 %v252
        %v379 = vunpack.c.h.b16 %v252
        %v380 = vunpack.c.l.b16 %v253
        %v381 = vunpack.c.h.b16 %v253
        %v382 = vpack.c.b16 %v320, %v318
        %v383 = vpack.c.b16 %v321, %v319
        %v384 = vpack.c.b16 %v324, %v322
        %v385 = vpack.c.b16 %v325, %v323
        %v386 = vpack.c.b16 %v328, %v326
        %v387 = vpack.c.b16 %v329, %v327
        %v388 = vpack.c.b16 %v332, %v330
        %v389 = vpack.c.b16 %v333, %v331
        %v390 = vpack.c.b16 %v336, %v334
        %v391 = vpack.c.b16 %v337, %v335
        %v392 = vpack.c.b16 %v340, %v338
        %v393 = vpack.c.b16 %v341, %v339
        %v394 = vpack.c.b16 %v344, %v342
        %v395 = vpack.c.b16 %v345, %v343
        %v396 = vpack.c.b16 %v348, %v346
        %v397 = vpack.c.b16 %v349, %v347
        %v398 = vpack.c.b16 %v352, %v350
        %v399 = vpack.c.b16 %v353, %v351
        %v400 = vpack.c.b16 %v356, %v354
        %v401 = vpack.c.b16 %v357, %v355
        %v402 = vpack.c.b16 %v360, %v358
        %v403 = vpack.c.b16 %v361, %v359
        %v404 = vpack.c.b16 %v364, %v362
        %v405 = vpack.c.b16 %v365, %v363
        %v406 = vpack.c.b16 %v368, %v366
        %v407 = vpack.c.b16 %v369, %v367
        %v408 = vpack.c.b16 %v372, %v370
        %v409 = vpack.c.b16 %v373, %v371
        %v410 = vpack.c.b16 %v376, %v374
        %v411 = vpack.c.b16 %v377, %v375
        %v412 = vpack.c.b16 %v380, %v378
        %v413 = vpack.c.b16 %v381, %v379
        %v478 = vunpack.c.l.b16 %v254
        %v479 = vunpack.c.l.b16 %v255
        %v480 = vunpack.c.l.b16 %v256
        %v481 = vunpack.c.l.b16 %v257
        %v482 = vunpack.c.l.b16 %v258
        %v483 = vunpack.c.l.b16 %v259
        %v484 = vunpack.c.l.b16 %v260
        %v485 = vunpack.c.l.b16 %v261
        %v486 = vunpack.c.l.b16 %v262
        %v487 = vunpack.c.l.b16 %v263
        %v488 = vunpack.c.l.b16 %v264
        %v489 = vunpack.c.l.b16 %v265
        %v490 = vunpack.c.l.b16 %v266
        %v491 = vunpack.c.l.b16 %v267
        %v492 = vunpack.c.l.b16 %v268
        %v493 = vunpack.c.l.b16 %v269
        %v494 = vunpack.c.l.b16 %v270
        %v495 = vunpack.c.l.b16 %v271
        %v496 = vunpack.c.l.b16 %v272
        %v497 = vunpack.c.l.b16 %v273
        %v498 = vunpack.c.l.b16 %v274
        %v499 = vunpack.c.l.b16 %v275
        %v500 = vunpack.c.l.b16 %v276
        %v501 = vunpack.c.l.b16 %v277
        %v502 = vunpack.c.l.b16 %v278
        %v503 = vunpack.c.l.b16 %v279
        %v504 = vunpack.c.l.b16 %v280
        %v505 = vunpack.c.l.b16 %v281
        %v506 = vunpack.c.l.b16 %v282
        %v507 = vunpack.c.l.b16 %v283
        %v508 = vunpack.c.l.b16 %v284
        %v509 = vunpack.c.l.b16 %v285
        %v510 = vpack.c.b16 %v479, %v478
        %v511 = vpack.c.b16 %v481, %v480
        %v512 = vpack.c.b16 %v483, %v482
        %v513 = vpack.c.b16 %v485, %v484
        %v514 = vpack.c.b16 %v487, %v486
        %v515 = vpack.c.b16 %v489, %v488
        %v516 = vpack.c.b16 %v491, %v490
        %v517 = vpack.c.b16 %v493, %v492
        %v518 = vpack.c.b16 %v495, %v494
        %v519 = vpack.c.b16 %v497, %v496
        %v520 = vpack.c.b16 %v499, %v498
        %v521 = vpack.c.b16 %v501, %v500
        %v522 = vpack.c.b16 %v503, %v502
        %v523 = vpack.c.b16 %v505, %v504
        %v524 = vpack.c.b16 %v507, %v506
        %v525 = vpack.c.b16 %v509, %v508
        %542 = vmatprep.subr.bf16.mxu0 0
        %543 = vmatpush1.bf16.msra.mxu0 %v510
        %544 = vmatprep.subr.bf16.mxu0 0
        %545 = vmatpush1.bf16.msra.mxu0 %v511
        %546 = vmatprep.subr.bf16.mxu0 0
        %547 = vmatpush1.bf16.msra.mxu0 %v512
        %548 = vmatprep.subr.bf16.mxu0 0
        %549 = vmatpush1.bf16.msra.mxu0 %v513
        %550 = vmatprep.subr.bf16.mxu0 0
        %551 = vmatpush1.bf16.msra.mxu0 %v514
        %552 = vmatprep.subr.bf16.mxu0 0
        %553 = vmatpush1.bf16.msra.mxu0 %v515
        %554 = vmatprep.subr.bf16.mxu0 0
        %555 = vmatpush1.bf16.msra.mxu0 %v516
        %556 = vmatprep.subr.bf16.mxu0 0
        %557 = vmatpush1.bf16.msra.mxu0 %v517
        %558 = vmatprep.subr.bf16.mxu0 0
        %559 = vmatpush1.bf16.msra.mxu0 %v518
        %560 = vmatprep.subr.bf16.mxu0 0
        %561 = vmatpush1.bf16.msra.mxu0 %v519
        %562 = vmatprep.subr.bf16.mxu0 0
        %563 = vmatpush1.bf16.msra.mxu0 %v520
        %564 = vmatprep.subr.bf16.mxu0 0
        %565 = vmatpush1.bf16.msra.mxu0 %v521
        %566 = vmatprep.subr.bf16.mxu0 0
        %567 = vmatpush1.bf16.msra.mxu0 %v522
        %568 = vmatprep.subr.bf16.mxu0 0
        %569 = vmatpush1.bf16.msra.mxu0 %v523
        %570 = vmatprep.subr.bf16.mxu0 0
        %571 = vmatpush1.bf16.msra.mxu0 %v524
        %572 = vmatprep.subr.bf16.mxu0 0
        %573 = vmatpush1.bf16.msra.mxu0 %v525
        %574 = vmatprep.mubr.bf16.mxu0 %v383
        %575 = vmatmul.mubr.bf16.gmra.mrb[0].mxu0 %v382
        %v576 = vpop.f32.mrb[0].mxu0
        %v577 = vadd.f32 0.0, %v576
        %v578 = vpop.f32.mrb[0].mxu0
        %v579 = vpop.f32.mrb[0].mxu0
        %v580 = vadd.f32 0.0, %v579
        %v581 = vpop.f32.mrb[0].mxu0
        %582 = vmatprep.mubr.bf16.mxu0 %v385
        %583 = vmatmul.mubr.bf16.gmra.mrb[0].mxu0 %v384
        %v584 = vpop.f32.mrb[0].mxu0
        %v585 = vadd.f32 0.0, %v584
        %v586 = vpop.f32.mrb[0].mxu0
        %v587 = vpop.f32.mrb[0].mxu0
        %v588 = vadd.f32 0.0, %v587
        %v589 = vpop.f32.mrb[0].mxu0
        %590 = vmatprep.mubr.bf16.mxu0 %v387
        %591 = vmatmul.mubr.bf16.gmra.mrb[0].mxu0 %v386
        %v592 = vpop.f32.mrb[0].mxu0
        %v593 = vadd.f32 0.0, %v592
        %v594 = vpop.f32.mrb[0].mxu0
        %v595 = vpop.f32.mrb[0].mxu0
        %v596 = vadd.f32 0.0, %v595
        %v597 = vpop.f32.mrb[0].mxu0
        %598 = vmatprep.mubr.bf16.mxu0 %v389
        %599 = vmatmul.mubr.bf16.gmra.mrb[0].mxu0 %v388
        %v600 = vpop.f32.mrb[0].mxu0
        %v601 = vadd.f32 0.0, %v600
        %v602 = vpop.f32.mrb[0].mxu0
        %v603 = vpop.f32.mrb[0].mxu0
        %v604 = vadd.f32 0.0, %v603
        %v605 = vpop.f32.mrb[0].mxu0
        %606 = vmatprep.mubr.bf16.mxu0 %v391
        %607 = vmatmul.mubr.bf16.gmra.mrb[0].mxu0 %v390
        %v608 = vpop.f32.mrb[0].mxu0
        %v609 = vadd.f32 0.0, %v608
        %v610 = vpop.f32.mrb[0].mxu0
        %v611 = vpop.f32.mrb[0].mxu0
        %v612 = vadd.f32 0.0, %v611
        %v613 = vpop.f32.mrb[0].mxu0
        %614 = vmatprep.mubr.bf16.mxu0 %v393
        %615 = vmatmul.mubr.bf16.gmra.mrb[0].mxu0 %v392
        %v616 = vpop.f32.mrb[0].mxu0
        %v617 = vadd.f32 0.0, %v616
        %v618 = vpop.f32.mrb[0].mxu0
        %v619 = vpop.f32.mrb[0].mxu0
        %v620 = vadd.f32 0.0, %v619
        %v621 = vpop.f32.mrb[0].mxu0
        %622 = vmatprep.mubr.bf16.mxu0 %v395
        %623 = vmatmul.mubr.bf16.gmra.mrb[0].mxu0 %v394
        %v624 = vpop.f32.mrb[0].mxu0
        %v625 = vadd.f32 0.0, %v624
        %v626 = vpop.f32.mrb[0].mxu0
        %v627 = vpop.f32.mrb[0].mxu0
        %v628 = vadd.f32 0.0, %v627
        %v629 = vpop.f32.mrb[0].mxu0
        %630 = vmatprep.mubr.bf16.mxu0 %v397
        %631 = vmatmul.mubr.bf16.gmra.mrb[0].mxu0 %v396
        %v632 = vpop.f32.mrb[0].mxu0
        %v633 = vadd.f32 0.0, %v632
        %v634 = vpop.f32.mrb[0].mxu0
        %v635 = vpop.f32.mrb[0].mxu0
        %v636 = vadd.f32 0.0, %v635
        %v637 = vpop.f32.mrb[0].mxu0
        %638 = vmatprep.mubr.bf16.mxu0 %v399
        %639 = vmatmul.mubr.bf16.gmra.mrb[0].mxu0 %v398
        %v640 = vpop.f32.mrb[0].mxu0
        %v641 = vadd.f32 0.0, %v640
        %v642 = vpop.f32.mrb[0].mxu0
        %v643 = vpop.f32.mrb[0].mxu0
        %v644 = vadd.f32 0.0, %v643
        %v645 = vpop.f32.mrb[0].mxu0
        %646 = vmatprep.mubr.bf16.mxu0 %v401
        %647 = vmatmul.mubr.bf16.gmra.mrb[0].mxu0 %v400
        %v648 = vpop.f32.mrb[0].mxu0
        %v649 = vadd.f32 0.0, %v648
        %v650 = vpop.f32.mrb[0].mxu0
        %v651 = vpop.f32.mrb[0].mxu0
        %v652 = vadd.f32 0.0, %v651
        %v653 = vpop.f32.mrb[0].mxu0
        %654 = vmatprep.mubr.bf16.mxu0 %v403
        %655 = vmatmul.mubr.bf16.gmra.mrb[0].mxu0 %v402
        %v656 = vpop.f32.mrb[0].mxu0
        %v657 = vadd.f32 0.0, %v656
        %v658 = vpop.f32.mrb[0].mxu0
        %v659 = vpop.f32.mrb[0].mxu0
        %v660 = vadd.f32 0.0, %v659
        %v661 = vpop.f32.mrb[0].mxu0
        %662 = vmatprep.mubr.bf16.mxu0 %v405
        %663 = vmatmul.mubr.bf16.gmra.mrb[0].mxu0 %v404
        %v664 = vpop.f32.mrb[0].mxu0
        %v665 = vadd.f32 0.0, %v664
        %v666 = vpop.f32.mrb[0].mxu0
        %v667 = vpop.f32.mrb[0].mxu0
        %v668 = vadd.f32 0.0, %v667
        %v669 = vpop.f32.mrb[0].mxu0
        %670 = vmatprep.mubr.bf16.mxu0 %v407
        %671 = vmatmul.mubr.bf16.gmra.mrb[0].mxu0 %v406
        %v672 = vpop.f32.mrb[0].mxu0
        %v673 = vadd.f32 0.0, %v672
        %v674 = vpop.f32.mrb[0].mxu0
        %v675 = vpop.f32.mrb[0].mxu0
        %v676 = vadd.f32 0.0, %v675
        %v677 = vpop.f32.mrb[0].mxu0
        %678 = vmatprep.mubr.bf16.mxu0 %v409
        %679 = vmatmul.mubr.bf16.gmra.mrb[0].mxu0 %v408
        %v680 = vpop.f32.mrb[0].mxu0
        %v681 = vadd.f32 0.0, %v680
        %v682 = vpop.f32.mrb[0].mxu0
        %v683 = vpop.f32.mrb[0].mxu0
        %v684 = vadd.f32 0.0, %v683
        %v685 = vpop.f32.mrb[0].mxu0
        %686 = vmatprep.mubr.bf16.mxu0 %v411
        %687 = vmatmul.mubr.bf16.gmra.mrb[0].mxu0 %v410
        %v688 = vpop.f32.mrb[0].mxu0
        %v689 = vadd.f32 0.0, %v688
        %v690 = vpop.f32.mrb[0].mxu0
        %v691 = vpop.f32.mrb[0].mxu0
        %v692 = vadd.f32 0.0, %v691
        %v693 = vpop.f32.mrb[0].mxu0
        %694 = vmatprep.mubr.bf16.mxu0 %v413
        %695 = vmatmul.mubr.bf16.gmra.mrb[0].mxu0 %v412
        %v696 = vpop.f32.mrb[0].mxu0
        %v697 = vadd.f32 0.0, %v696
        %v698 = vpop.f32.mrb[0].mxu0
        %v699 = vpop.f32.mrb[0].mxu0
        %v700 = vadd.f32 0.0, %v699
        %v701 = vpop.f32.mrb[0].mxu0
        %702 = vdwg.mxu0
        %v703 = vld [vmem:[%s2] sm:$0x1]
        %v705 = vlaneseq
        %v706 = vshrl.u32 %v705, 7
        %v707 = vsub.s32 0, %v706
        %v708 = vrot.slane %v703, %v707
        %v710 = vmul.f32 %v577, %v708
        %v711 = vmul.f32 %v580, %v708
        %v712 = vmul.f32 %v585, %v708
        %v713 = vmul.f32 %v588, %v708
        %v714 = vmul.f32 %v593, %v708
        %v715 = vmul.f32 %v596, %v708
        %v716 = vmul.f32 %v601, %v708
        %v717 = vmul.f32 %v604, %v708
        %v718 = vmul.f32 %v609, %v708
        %v719 = vmul.f32 %v612, %v708
        %v720 = vmul.f32 %v617, %v708
        %v721 = vmul.f32 %v620, %v708
        %v722 = vmul.f32 %v625, %v708
        %v723 = vmul.f32 %v628, %v708
        %v724 = vmul.f32 %v633, %v708
        %v725 = vmul.f32 %v636, %v708
        %v726 = vmul.f32 %v641, %v708
        %v727 = vmul.f32 %v644, %v708
        %v728 = vmul.f32 %v649, %v708
        %v729 = vmul.f32 %v652, %v708
        %v730 = vmul.f32 %v657, %v708
        %v731 = vmul.f32 %v660, %v708
        %v732 = vmul.f32 %v665, %v708
        %v733 = vmul.f32 %v668, %v708
        %v734 = vmul.f32 %v673, %v708
        %v735 = vmul.f32 %v676, %v708
        %v736 = vmul.f32 %v681, %v708
        %v737 = vmul.f32 %v684, %v708
        %v738 = vmul.f32 %v689, %v708
        %v739 = vmul.f32 %v692, %v708
        %v740 = vmul.f32 %v697, %v708
        %v741 = vmul.f32 %v700, %v708
        %v742 = vld [vmem:[%s3] sm:$0x1]
        %v744 = vlaneseq
        %v745 = vshrl.u32 %v744, 7
        %v746 = vsub.s32 0, %v745
        %v747 = vrot.slane %v742, %v746
        %v749 = vadd.f32 %v710, %v747
        %v750 = vadd.f32 %v711, %v747
        %v751 = vadd.f32 %v712, %v747
        %v752 = vadd.f32 %v713, %v747
        %v753 = vadd.f32 %v714, %v747
        %v754 = vadd.f32 %v715, %v747
        %v755 = vadd.f32 %v716, %v747
        %v756 = vadd.f32 %v717, %v747
        %v757 = vadd.f32 %v718, %v747
        %v758 = vadd.f32 %v719, %v747
        %v759 = vadd.f32 %v720, %v747
        %v760 = vadd.f32 %v721, %v747
        %v761 = vadd.f32 %v722, %v747
        %v762 = vadd.f32 %v723, %v747
        %v763 = vadd.f32 %v724, %v747
        %v764 = vadd.f32 %v725, %v747
        %v765 = vadd.f32 %v726, %v747
        %v766 = vadd.f32 %v727, %v747
        %v767 = vadd.f32 %v728, %v747
        %v768 = vadd.f32 %v729, %v747
        %v769 = vadd.f32 %v730, %v747
        %v770 = vadd.f32 %v731, %v747
        %v771 = vadd.f32 %v732, %v747
        %v772 = vadd.f32 %v733, %v747
        %v773 = vadd.f32 %v734, %v747
        %v774 = vadd.f32 %v735, %v747
        %v775 = vadd.f32 %v736, %v747
        %v776 = vadd.f32 %v737, %v747
        %v777 = vadd.f32 %v738, %v747
        %v778 = vadd.f32 %v739, %v747
        %v779 = vadd.f32 %v740, %v747
        %v780 = vadd.f32 %v741, %v747
        %v781 = vmax.f32 %v749, 0.0
        %v782 = vmax.f32 %v750, 0.0
        %v783 = vmax.f32 %v751, 0.0
        %v784 = vmax.f32 %v752, 0.0
        %v785 = vmax.f32 %v753, 0.0
        %v786 = vmax.f32 %v754, 0.0
        %v787 = vmax.f32 %v755, 0.0
        %v788 = vmax.f32 %v756, 0.0
        %v789 = vmax.f32 %v757, 0.0
        %v790 = vmax.f32 %v758, 0.0
        %v791 = vmax.f32 %v759, 0.0
        %v792 = vmax.f32 %v760, 0.0
        %v793 = vmax.f32 %v761, 0.0
        %v794 = vmax.f32 %v762, 0.0
        %v795 = vmax.f32 %v763, 0.0
        %v796 = vmax.f32 %v764, 0.0
        %v797 = vmax.f32 %v765, 0.0
        %v798 = vmax.f32 %v766, 0.0
        %v799 = vmax.f32 %v767, 0.0
        %v800 = vmax.f32 %v768, 0.0
        %v801 = vmax.f32 %v769, 0.0
        %v802 = vmax.f32 %v770, 0.0
        %v803 = vmax.f32 %v771, 0.0
        %v804 = vmax.f32 %v772, 0.0
        %v805 = vmax.f32 %v773, 0.0
        %v806 = vmax.f32 %v774, 0.0
        %v807 = vmax.f32 %v775, 0.0
        %v808 = vmax.f32 %v776, 0.0
        %v809 = vmax.f32 %v777, 0.0
        %v810 = vmax.f32 %v778, 0.0
        %v811 = vmax.f32 %v779, 0.0
        %v812 = vmax.f32 %v780, 0.0
        %v813 = vpack.c.bf16 %v782, %v781
        %v814 = vpack.c.bf16 %v784, %v783
        %v815 = vpack.c.bf16 %v786, %v785
        %v816 = vpack.c.bf16 %v788, %v787
        %v817 = vpack.c.bf16 %v790, %v789
        %v818 = vpack.c.bf16 %v792, %v791
        %v819 = vpack.c.bf16 %v794, %v793
        %v820 = vpack.c.bf16 %v796, %v795
        %v821 = vpack.c.bf16 %v798, %v797
        %v822 = vpack.c.bf16 %v800, %v799
        %v823 = vpack.c.bf16 %v802, %v801
        %v824 = vpack.c.bf16 %v804, %v803
        %v825 = vpack.c.bf16 %v806, %v805
        %v826 = vpack.c.bf16 %v808, %v807
        %v827 = vpack.c.bf16 %v810, %v809
        %v828 = vpack.c.bf16 %v812, %v811
        %v845 = vunpack.c.l.b16 %v813
        %v846 = vunpack.c.h.b16 %v813
        %v847 = vunpack.c.l.b16 %v814
        %v848 = vunpack.c.h.b16 %v814
        %v849 = vunpack.c.l.b16 %v815
        %v850 = vunpack.c.h.b16 %v815
        %v851 = vunpack.c.l.b16 %v816
        %v852 = vunpack.c.h.b16 %v816
        %v853 = vunpack.c.l.b16 %v817
        %v854 = vunpack.c.h.b16 %v817
        %v855 = vunpack.c.l.b16 %v818
        %v856 = vunpack.c.h.b16 %v818
        %v857 = vunpack.c.l.b16 %v819
        %v858 = vunpack.c.h.b16 %v819
        %v859 = vunpack.c.l.b16 %v820
        %v860 = vunpack.c.h.b16 %v820
        %v861 = vunpack.c.l.b16 %v821
        %v862 = vunpack.c.h.b16 %v821
        %v863 = vunpack.c.l.b16 %v822
        %v864 = vunpack.c.h.b16 %v822
        %v865 = vunpack.c.l.b16 %v823
        %v866 = vunpack.c.h.b16 %v823
        %v867 = vunpack.c.l.b16 %v824
        %v868 = vunpack.c.h.b16 %v824
        %v869 = vunpack.c.l.b16 %v825
        %v870 = vunpack.c.h.b16 %v825
        %v871 = vunpack.c.l.b16 %v826
        %v872 = vunpack.c.h.b16 %v826
        %v873 = vunpack.c.l.b16 %v827
        %v874 = vunpack.c.h.b16 %v827
        %v875 = vunpack.c.l.b16 %v828
        %v876 = vunpack.c.h.b16 %v828
        %v877 = vpack.c.b16 %v845, %v845
        %v878 = vpack.c.b16 %v846, %v846
        %v879 = vpack.c.b16 %v847, %v847
        %v880 = vpack.c.b16 %v848, %v848
        %v881 = vpack.c.b16 %v849, %v849
        %v882 = vpack.c.b16 %v850, %v850
        %v883 = vpack.c.b16 %v851, %v851
        %v884 = vpack.c.b16 %v852, %v852
        %v885 = vpack.c.b16 %v853, %v853
        %v886 = vpack.c.b16 %v854, %v854
        %v887 = vpack.c.b16 %v855, %v855
        %v888 = vpack.c.b16 %v856, %v856
        %v889 = vpack.c.b16 %v857, %v857
        %v890 = vpack.c.b16 %v858, %v858
        %v891 = vpack.c.b16 %v859, %v859
        %v892 = vpack.c.b16 %v860, %v860
        %v893 = vpack.c.b16 %v861, %v861
        %v894 = vpack.c.b16 %v862, %v862
        %v895 = vpack.c.b16 %v863, %v863
        %v896 = vpack.c.b16 %v864, %v864
        %v897 = vpack.c.b16 %v865, %v865
        %v898 = vpack.c.b16 %v866, %v866
        %v899 = vpack.c.b16 %v867, %v867
        %v900 = vpack.c.b16 %v868, %v868
        %v901 = vpack.c.b16 %v869, %v869
        %v902 = vpack.c.b16 %v870, %v870
        %v903 = vpack.c.b16 %v871, %v871
        %v904 = vpack.c.b16 %v872, %v872
        %v905 = vpack.c.b16 %v873, %v873
        %v906 = vpack.c.b16 %v874, %v874
        %v907 = vpack.c.b16 %v875, %v875
        %v908 = vpack.c.b16 %v876, %v876
        %vm941 = vcmask 519168
        %942 = vst.msk [vmem:[%s219] sm:$0xf] %vm941, %v877
        %943 = vst.msk [vmem:[%s219 + $0x4] sm:$0xf] %vm941, %v878
        %944 = vst.msk [vmem:[%s219 + $0x8] sm:$0xf] %vm941, %v879
        %945 = vst.msk [vmem:[%s219 + $0xc] sm:$0xf] %vm941, %v880
        %946 = vst.msk [vmem:[%s219 + $0x10] sm:$0xf] %vm941, %v881
        %947 = vst.msk [vmem:[%s219 + $0x14] sm:$0xf] %vm941, %v882
        %948 = vst.msk [vmem:[%s219 + $0x18] sm:$0xf] %vm941, %v883
        %949 = vst.msk [vmem:[%s219 + $0x1c] sm:$0xf] %vm941, %v884
        %950 = vst.msk [vmem:[%s219 + $0x20] sm:$0xf] %vm941, %v885
        %951 = vst.msk [vmem:[%s219 + $0x24] sm:$0xf] %vm941, %v886
        %952 = vst.msk [vmem:[%s219 + $0x28] sm:$0xf] %vm941, %v887
        %953 = vst.msk [vmem:[%s219 + $0x2c] sm:$0xf] %vm941, %v888
        %954 = vst.msk [vmem:[%s219 + $0x30] sm:$0xf] %vm941, %v889
        %955 = vst.msk [vmem:[%s219 + $0x34] sm:$0xf] %vm941, %v890
        %956 = vst.msk [vmem:[%s219 + $0x38] sm:$0xf] %vm941, %v891
        %957 = vst.msk [vmem:[%s219 + $0x3c] sm:$0xf] %vm941, %v892
        %958 = vst.msk [vmem:[%s219 + $0x40] sm:$0xf] %vm941, %v893
        %959 = vst.msk [vmem:[%s219 + $0x44] sm:$0xf] %vm941, %v894
        %960 = vst.msk [vmem:[%s219 + $0x48] sm:$0xf] %vm941, %v895
        %961 = vst.msk [vmem:[%s219 + $0x4c] sm:$0xf] %vm941, %v896
        %962 = vst.msk [vmem:[%s219 + $0x50] sm:$0xf] %vm941, %v897
        %963 = vst.msk [vmem:[%s219 + $0x54] sm:$0xf] %vm941, %v898
        %964 = vst.msk [vmem:[%s219 + $0x58] sm:$0xf] %vm941, %v899
        %965 = vst.msk [vmem:[%s219 + $0x5c] sm:$0xf] %vm941, %v900
        %966 = vst.msk [vmem:[%s219 + $0x60] sm:$0xf] %vm941, %v901
        %967 = vst.msk [vmem:[%s219 + $0x64] sm:$0xf] %vm941, %v902
        %968 = vst.msk [vmem:[%s219 + $0x68] sm:$0xf] %vm941, %v903
        %969 = vst.msk [vmem:[%s219 + $0x6c] sm:$0xf] %vm941, %v904
        %970 = vst.msk [vmem:[%s219 + $0x70] sm:$0xf] %vm941, %v905
        %971 = vst.msk [vmem:[%s219 + $0x74] sm:$0xf] %vm941, %v906
        %972 = vst.msk [vmem:[%s219 + $0x78] sm:$0xf] %vm941, %v907
        %973 = vst.msk [vmem:[%s219 + $0x7c] sm:$0xf] %vm941, %v908
        %s974 = smul.u32 32, %s18
        %p975 = scmp.lt.s32.totalorder %s974, 63
        %s976 = scalar_select %p975, %s974, 63
        %s977 = smul.addr %s976, 4
        %s978 = scalar_lea.vmem %s4, %s977
        // Predicated region
        $region41: #{tpu_custom_call.1} parent=35 // pred_check
          %p979 = pneg %p125
        $region42: #{tpu_custom_call.1} parent=35 // pred_check_branch
          %981 = sbr.rel (%p979) target = $region44
        $region43: #{tpu_custom_call.1} parent=35 // pred_region
          %s982 = smul.u32 32, %s18
        $region44: #{tpu_custom_call.1} parent=35 // pred_fallthru
          _
      $region36: #{tpu_custom_call.1} parent=5 // pred_fallthru
        _
      %p983 = scmp.le.s32.totalorder 2, %s13
      // Predicated region
      $region45: #{tpu_custom_call.1} parent=5 // pred_check
        %p984 = pneg %p983
      $region46: #{tpu_custom_call.1} parent=5 // pred_check_branch
        %986 = sbr.rel (%p984) target = $region48
      $region47: #{tpu_custom_call.1} parent=5 // pred_region
        %s987 = ssub.s32 %s13, 2
        // Predicated region
        $region49: #{tpu_custom_call.1} parent=47 // pred_check
          %p988 = pneg %p131
        $region50: #{tpu_custom_call.1} parent=47 // pred_check_branch
          %990 = sbr.rel (%p988) target = $region52
        $region51: #{tpu_custom_call.1} parent=47 // pred_region
          %s991 = smul.u32 32, %s19
          %p992 = scmp.lt.s32.totalorder %s991, 63
          %s993 = scalar_select %p992, %s991, 63
          %s994 = smul.addr %s993, 4
          %s995 = scalar_lea.vmem %s4, %s994
        $region52: #{tpu_custom_call.1} parent=47 // pred_fallthru
          _
      $region48: #{tpu_custom_call.1} parent=5 // pred_fallthru
        _
    $region6: #{tpu_custom_call.1} parent=1 // loop_footer
      %s17 = sadd.s32 1, %s13
    $region7: #{tpu_custom_call.1} parent=1 // loop_footer_branch
      %12 = sbr.rel target = $region3
    $region8: #{tpu_custom_call.1} parent=1 // loop_exit
      _
    %996 = vsyncpa [#allocation3], 1
    %s997 = scalar_lea.sflag [#allocation3], 1
    %998 = vsyncpa %s997, 1

</llo_original>
